<compile_context>
chip_gen: v6e
topology: v6e:2x2x1
jax: 0.10.0
libtpu: 0.0.40
codegen_flags: <defaults>
</compile_context>

<pallas_src>
import functools

import jax
import jax.numpy as jnp
from jax.experimental import pallas as pl
from jax.experimental.pallas import tpu as pltpu


def _round_up(x, m):
    return ((x + m - 1) // m) * m


def _generation_tile_defaults():
    """Roofline-driven (tm, tn, tk) defaults per TPU generation."""
    try:
        kind = jax.devices()[0].device_kind.lower()
    except Exception:  # pragma: no cover - defensive; fall back to conservative tiles
        kind = ""
    if "v6" in kind or "trillium" in kind:
        # 128 MiB VMEM, needs ~680 flop/byte: 1024x1024 output tiles, K streamed in 512s.
        return 1024, 1024, 512
    if "v5 lite" in kind or "v5e" in kind or "v5litepod" in kind:
        # Needs only ~240 flop/byte: 512-tiles reach the 0.82 TB/s roofline.
        return 512, 512, 512
    # v7x (64 MiB VMEM) and anything unknown: 512-tiles stay well inside VMEM and
    # already exceed the ~310 flop/byte v7x requirement.
    return 512, 512, 512


def plan_tiles(M, K, N, *, tm=None, tn=None, tk=None):
    """Choose tiles and padded extents. Small dims only pad to the bf16 minimum tile
    (16, 128) and the tile shrinks to the padded extent, collapsing that grid axis."""
    tm_d, tn_d, tk_d = _generation_tile_defaults()
    tm = tm or tm_d
    tn = tn or tn_d
    tk = tk or tk_d
    assert tm % 16 == 0 and tn % 128 == 0 and tk % 128 == 0, (
        "bf16 operand tiles require tm % 16 == 0 and tn/tk % 128 == 0")
    Mp = _round_up(M, 16)     # bf16 sublane tile
    Kp = _round_up(K, 128)
    Np = _round_up(N, 128)    # lane-dense output stores
    tm = min(tm, Mp)
    tk = min(tk, Kp)
    tn = min(tn, Np)
    Mp = _round_up(Mp, tm)
    Kp = _round_up(Kp, tk)
    Np = _round_up(Np, tn)
    return dict(tm=tm, tn=tn, tk=tk, Mp=Mp, Np=Np, Kp=Kp)


def prepare_rep_layer_params(w, b, delta_scale, delta_bias, *, Np, Kp,
                             matmul_dtype=jnp.bfloat16, **_unused):
    """Fold the RED edit into the Linear parameters and pad to tile multiples.

        (xW + b) * s + d  ==  x (W * s) + (b * s + d)   (exact algebra)

    Call once per weight / delta update and cache — this is the weight-sized HBM
    pass the per-call hot path must not repeat.
    """
    K, N = w.shape
    w_fused = (w * delta_scale[None, :]).astype(matmul_dtype)
    b_fused = (b * delta_scale + delta_bias).astype(jnp.float32)
    w_p = jnp.pad(w_fused, ((0, Kp - K), (0, Np - N)))
    b_p = jnp.pad(b_fused, (0, Np - N)).reshape(1, Np)
    return w_p, b_p


# ----------------------------- kernels ---------------------------------------


def _matmul_bias_kernel(x_ref, w_ref, b_ref, o_ref):
    """K fits a single tile: whole reduction in one MXU call, bias fused in epilogue."""
    o_ref[...] = (jnp.dot(x_ref[...], w_ref[...],
                          preferred_element_type=jnp.float32)
                  + b_ref[...]).astype(o_ref.dtype)


def _matmul_bias_kacc_kernel(x_ref, w_ref, b_ref, o_ref):
    """K-reduction path: the f32 output block is resident across k (its index_map
    ignores k), so accumulate directly into it — no VMEM scratch needed."""
    @pl.when(pl.program_id(2) == 0)
    def _():
        o_ref[...] = jnp.broadcast_to(b_ref[...], o_ref.shape)

    o_ref[...] += jnp.dot(x_ref[...], w_ref[...],
                          preferred_element_type=jnp.float32)


# ----------------------------- hot path ---------------------------------------


def representation_layer_apply(x, w_p, b_p, *, out_features,
                               tm, tn, tk, Mp, Np, Kp,
                               matmul_dtype=jnp.bfloat16):
    """Apply the fused (Linear + RED) layer. w_p/b_p come from prepare_rep_layer_params."""
    B, S, K = x.shape
    M = B * S
    N = out_features

    x2d = x.reshape(M, K).astype(matmul_dtype)
    if Mp != M or Kp != K:
        x2d = jnp.pad(x2d, ((0, Mp - M), (0, Kp - K)))  # zero padding is exact for matmul

    # Working set at the largest tile choice (1024x1024x512) is ~12 MiB double-buffered;
    # 48 MiB leaves headroom even on v7x's 64 MiB physical VMEM.
    cparams_2d = pltpu.CompilerParams(
        dimension_semantics=("parallel", "parallel"),
        vmem_limit_bytes=48 * 1024 * 1024,
    )
    cparams_3d = pltpu.CompilerParams(
        dimension_semantics=("parallel", "parallel", "arbitrary"),
        vmem_limit_bytes=48 * 1024 * 1024,
    )

    grid_mn = (Mp // tm, Np // tn)

    if Kp == tk:
        # K collapsed into a single tile: no reduction axis, no accumulator, no pl.when.
        out = pl.pallas_call(
            _matmul_bias_kernel,
            out_shape=jax.ShapeDtypeStruct((Mp, Np), jnp.float32),
            grid_spec=pltpu.PrefetchScalarGridSpec(
                num_scalar_prefetch=0,
                grid=grid_mn,
                in_specs=[
                    pl.BlockSpec((tm, tk), lambda i, j: (i, 0)),   # x tile
                    pl.BlockSpec((tk, tn), lambda i, j: (0, j)),   # fused weight tile
                    pl.BlockSpec((1, tn), lambda i, j: (0, j)),    # fused bias
                ],
                out_specs=pl.BlockSpec((tm, tn), lambda i, j: (i, j)),
            ),
            compiler_params=cparams_2d,
        )(x2d, w_p, b_p)
    else:
        out = pl.pallas_call(
            _matmul_bias_kacc_kernel,
            out_shape=jax.ShapeDtypeStruct((Mp, Np), jnp.float32),
            grid_spec=pltpu.PrefetchScalarGridSpec(
                num_scalar_prefetch=0,
                grid=grid_mn + (Kp // tk,),
                in_specs=[
                    pl.BlockSpec((tm, tk), lambda i, j, k: (i, k)),   # x tile
                    pl.BlockSpec((tk, tn), lambda i, j, k: (k, j)),   # fused weight tile
                    pl.BlockSpec((1, tn), lambda i, j, k: (0, j)),    # fused bias
                ],
                out_specs=pl.BlockSpec((tm, tn), lambda i, j, k: (i, j)),
            ),
            compiler_params=cparams_3d,
        )(x2d, w_p, b_p)

    if Mp != M or Np != N:
        out = out[:M, :N]
    return out.reshape(B, S, N)


def representation_layer(x, w, b, delta_scale, delta_bias, *, matmul_dtype=jnp.bfloat16):
    """One-shot convenience wrapper. For repeated calls with fixed weights, call
    plan_tiles + prepare_rep_layer_params once and reuse representation_layer_apply."""
    B, S, K = x.shape
    N = w.shape[1]
    plan = plan_tiles(B * S, K, N)
    w_p, b_p = prepare_rep_layer_params(w, b, delta_scale, delta_bias,
                                        matmul_dtype=matmul_dtype, **plan)
    return representation_layer_apply(x, w_p, b_p, out_features=N,
                                      matmul_dtype=matmul_dtype, **plan)


def reference(x, w, b, delta_scale, delta_bias):
    h = jnp.einsum("bsk,kn->bsn", x, w) + b
    return h * delta_scale + delta_bias


if __name__ == "__main__":
    # Small shapes implied by the forward: (batch, seq, hidden) token representations.
    B, S, K, N = 2, 8, 32, 32

    key = jax.random.PRNGKey(0)
    k_x, k_w, k_b, k_s, k_d = jax.random.split(key, 5)

    x = jax.random.normal(k_x, (B, S, K), dtype=jnp.float32)

    # Deterministic synthetic parameters (original_layer = Linear(K, N); RED edit vectors).
    w_t = jax.random.normal(k_w, (K, N), dtype=jnp.float32) * 0.05   # Linear weight, transposed
    b = jax.random.normal(k_b, (N,), dtype=jnp.float32) * 0.01
    delta_scale = 1.0 + 0.1 * jax.random.normal(k_s, (N,), dtype=jnp.float32)
    delta_bias = 0.01 * jax.random.normal(k_d, (N,), dtype=jnp.float32)

    # Hoisted prep: done once per weight / delta update (cacheable across calls).
    plan = plan_tiles(B * S, K, N)
    w_p, b_p = prepare_rep_layer_params(w_t, b, delta_scale, delta_bias, **plan)

    # Hot path: only x moves per call; tile plan is closed over as static config.
    apply_fn = jax.jit(functools.partial(representation_layer_apply,
                                         out_features=N, **plan))
    out = apply_fn(x, w_p, b_p)
    out = jax.block_until_ready(out)

    ref = reference(x, w_t, b, delta_scale, delta_bias)
    assert out.shape == (B, S, N)
    # bf16 matmul operands (f32 accumulation), weight scaled by delta_scale before the
    # bf16 cast -> compare against the f32 reference with a bf16-appropriate tolerance.
    assert jnp.allclose(out, ref, atol=2e-2, rtol=2e-2), "mismatch vs reference"

    # TODO(synk): op_position in {'res','res_with_attn','res_with_res'} would pass a second
    # residual input_tensor into original_layer; only the default 'ffn' Linear + RED path is modeled.
    print("KERNEL_OK")
</pallas_src>

<mosaic_0001>
module attributes {stable_mosaic.version = 11 : i64} {
  func.func @_matmul_bias_kernel(%arg0: i32, %arg1: i32, %arg2: memref<16x128xbf16, #tpu.memory_space<vmem>>, %arg3: memref<128x128xbf16, #tpu.memory_space<vmem>>, %arg4: memref<1x128xf32, #tpu.memory_space<vmem>>, %arg5: memref<16x128xf32, #tpu.memory_space<vmem>>) attributes {dimension_semantics = [#tpu.dimension_semantics<parallel>, #tpu.dimension_semantics<parallel>], iteration_bounds = array<i64: 1, 1>, scalar_prefetch = 0 : i64, scratch_operands = 0 : i64, tpu.core_type = #tpu.core_type<tc>, window_params = [{transform_indices = @transform_0, window_bounds = array<i64: 16, 128>}, {transform_indices = @transform_1, window_bounds = array<i64: 128, 128>}, {transform_indices = @transform_2, window_bounds = array<i64: 1, 128>}, {transform_indices = @transform_3, window_bounds = array<i64: 16, 128>}]} {
    %c0 = arith.constant 0 : index
    %c0_0 = arith.constant 0 : index
    %0 = vector.load %arg2[%c0, %c0_0] : memref<16x128xbf16, #tpu.memory_space<vmem>>, vector<16x128xbf16>
    %c0_1 = arith.constant 0 : index
    %c0_2 = arith.constant 0 : index
    %1 = vector.load %arg3[%c0_1, %c0_2] : memref<128x128xbf16, #tpu.memory_space<vmem>>, vector<128x128xbf16>
    %cst = arith.constant dense<0.000000e+00> : vector<16x128xf32>
    %2 = tpu.matmul %0, %1, %cst {dimension_numbers = #tpu.dot_dimension_numbers<[1], [0], [0], [1], [0, 0, 1, 1], [], []>} : vector<16x128xbf16>, vector<128x128xbf16>, vector<16x128xf32> -> vector<16x128xf32>
    %c0_3 = arith.constant 0 : index
    %c0_4 = arith.constant 0 : index
    %3 = vector.load %arg4[%c0_3, %c0_4] : memref<1x128xf32, #tpu.memory_space<vmem>>, vector<1x128xf32>
    %4 = vector.broadcast %3 : vector<1x128xf32> to vector<16x128xf32>
    %5 = arith.addf %2, %4 : vector<16x128xf32>
    %c0_5 = arith.constant 0 : index
    %c0_6 = arith.constant 0 : index
    %6 = vector.load %arg5[%c0_5, %c0_6] : memref<16x128xf32, #tpu.memory_space<vmem>>, vector<16x128xf32>
    tpu.vector_store %arg5[%c0_5, %c0_6], %5 {strides = array<i32>} : memref<16x128xf32, #tpu.memory_space<vmem>>, vector<16x128xf32>,
    return
  }
  func.func @transform_0(%arg0: i32, %arg1: i32) -> (i32, i32) {
    %c0_i32 = arith.constant 0 : i32
    %c0_i32_0 = arith.constant 0 : i32
    return %arg0, %c0_i32 : i32, i32
  }
  func.func @transform_1(%arg0: i32, %arg1: i32) -> (i32, i32) {
    %c0_i32 = arith.constant 0 : i32
    %c0_i32_0 = arith.constant 0 : i32
    return %c0_i32, %arg1 : i32, i32
  }
  func.func @transform_2(%arg0: i32, %arg1: i32) -> (i32, i32) {
    %c0_i32 = arith.constant 0 : i32
    %c0_i32_0 = arith.constant 0 : i32
    return %c0_i32, %arg1 : i32, i32
  }
  func.func @transform_3(%arg0: i32, %arg1: i32) -> (i32, i32) {
    %c0_i32 = arith.constant 0 : i32
    return %arg0, %arg1 : i32, i32
  }
}

</mosaic_0001>

<llo_original>
// kernel: representation_layer_apply.1
$region0: #{representation_layer_apply.1}
  #allocation0 [shape = 'u32[]', space=smem, size = 0x4, offset = 0x4, fixed_abs, tag = 'smem constant byte address 0x4 - core index']
  #allocation1 [shape = 'u32[144,128]{1,0:T(1,128)}', space=vmem, size = 0x12000, scoped, tag = 'internal scratch']
  %s0 = inlined_call_operand.vmem [shape: bf16[16,128], index: 0, kind: input, shape index: {}]
  %s1 = inlined_call_operand.hbm [shape: bf16[128,128], index: 1, kind: input, shape index: {}]
  %s2 = inlined_call_operand.vmem [shape: f32[1,128], index: 2, kind: input, shape index: {}]
  %s3 = inlined_call_operand.vmem [shape: f32[16,128], index: 3, kind: output, shape index: {}]
  %s4 = sld [smem:[#allocation0]]
  $region26: #{representation_layer_apply.1} parent=0
    _
  %s6 = ssub.s32 1, %s4
  %s7 = scalar_select 0, %s6, %s4
  $region1: #{representation_layer_apply.1} parent=0
    #allocation2 [shape = 'u8[32768]{0}', space=vmem, size = 0x8000, scoped, tag = 'input window, operand 1, single buffered']
    #allocation3 [shape = 's32[1]{0}', space=sflag, size = 0x4, scoped, tag = 'scoped memory for representation_layer_apply.1']
    %8 = vsyncpa [#allocation3], 0
    // Predicated region
    $region2: #{representation_layer_apply.1} parent=1 // pred_check
      _
    $region3: #{representation_layer_apply.1} parent=1 // pred_check_branch
      %10 = sbr.rel (0) target = $region5
    $region4: #{representation_layer_apply.1} parent=1 // pred_region
      _
    $region5: #{representation_layer_apply.1} parent=1 // pred_fallthru
      _
    // Predicated region
    $region6: #{representation_layer_apply.1} parent=1 // pred_check
      _
    $region7: #{representation_layer_apply.1} parent=1 // pred_check_branch
      %12 = sbr.rel (0) target = $region9
    $region8: #{representation_layer_apply.1} parent=1 // pred_region
      %s14 = ssub.s32 1024, 1024
      %15 = vsyncadd [#allocation3], %s14
      %s16 = sshll.u32 [#allocation2], 4
      %s17 = int_to_ptr.vmem [resolvable:$true] %s16
      %22 = dma.hbm_to_vmem [thread:$0]  %s1, 1024, %s17, [#allocation3], 64, 64, 4
    $region9: #{representation_layer_apply.1} parent=1 // pred_fallthru
      _
    // Predicated region
    $region10: #{representation_layer_apply.1} parent=1 // pred_check
      _
    $region11: #{representation_layer_apply.1} parent=1 // pred_check_branch
      %24 = sbr.rel (0) target = $region13
    $region12: #{representation_layer_apply.1} parent=1 // pred_region
      _
    $region13: #{representation_layer_apply.1} parent=1 // pred_fallthru
      _
    // Predicated region
    $region14: #{representation_layer_apply.1} parent=1 // pred_check
      _
    $region15: #{representation_layer_apply.1} parent=1 // pred_check_branch
      %26 = sbr.rel (0) target = $region17
    $region16: #{representation_layer_apply.1} parent=1 // pred_region
      %27 = dma.done [#allocation3], 1024
    $region17: #{representation_layer_apply.1} parent=1 // pred_fallthru
      _
    %v29 = vld [vmem:[%s0] sm:$0xf]
    %v30 = vld [vmem:[%s0 + $0x4] sm:$0xf]
    %v31 = vld [vmem:[#allocation2] sm:$0xf]
    %v32 = vld [vmem:[#allocation2 + $0x4] sm:$0xf]
    %v33 = vld [vmem:[#allocation2 + $0x8] sm:$0xf]
    %v34 = vld [vmem:[#allocation2 + $0xc] sm:$0xf]
    %v35 = vld [vmem:[#allocation2 + $0x10] sm:$0xf]
    %v36 = vld [vmem:[#allocation2 + $0x14] sm:$0xf]
    %v37 = vld [vmem:[#allocation2 + $0x18] sm:$0xf]
    %v38 = vld [vmem:[#allocation2 + $0x1c] sm:$0xf]
    %v39 = vld [vmem:[#allocation2 + $0x20] sm:$0xf]
    %v40 = vld [vmem:[#allocation2 + $0x24] sm:$0xf]
    %v41 = vld [vmem:[#allocation2 + $0x28] sm:$0xf]
    %v42 = vld [vmem:[#allocation2 + $0x2c] sm:$0xf]
    %v43 = vld [vmem:[#allocation2 + $0x30] sm:$0xf]
    %v44 = vld [vmem:[#allocation2 + $0x34] sm:$0xf]
    %v45 = vld [vmem:[#allocation2 + $0x38] sm:$0xf]
    %v46 = vld [vmem:[#allocation2 + $0x3c] sm:$0xf]
    %v47 = vld [vmem:[%s2] sm:$0x1]
    %v49 = vlaneseq
    %v50 = vshrl.u32 %v49, 7
    %v51 = vsub.s32 0, %v50
    %v52 = vrot.slane %v47, %v51
    %v56 = vunpack.c.l.b16 %v29
    %v57 = vunpack.c.l.b16 %v30
    %v58 = vpack.c.b16 %v57, %v56
    %v76 = vunpack.c.l.b16 %v31
    %v77 = vunpack.c.l.b16 %v32
    %v78 = vunpack.c.l.b16 %v33
    %v79 = vunpack.c.l.b16 %v34
    %v80 = vunpack.c.l.b16 %v35
    %v81 = vunpack.c.l.b16 %v36
    %v82 = vunpack.c.l.b16 %v37
    %v83 = vunpack.c.l.b16 %v38
    %v84 = vunpack.c.l.b16 %v39
    %v85 = vunpack.c.l.b16 %v40
    %v86 = vunpack.c.l.b16 %v41
    %v87 = vunpack.c.l.b16 %v42
    %v88 = vunpack.c.l.b16 %v43
    %v89 = vunpack.c.l.b16 %v44
    %v90 = vunpack.c.l.b16 %v45
    %v91 = vunpack.c.l.b16 %v46
    %v92 = vpack.c.b16 %v77, %v76
    %v93 = vpack.c.b16 %v79, %v78
    %v94 = vpack.c.b16 %v81, %v80
    %v95 = vpack.c.b16 %v83, %v82
    %v96 = vpack.c.b16 %v85, %v84
    %v97 = vpack.c.b16 %v87, %v86
    %v98 = vpack.c.b16 %v89, %v88
    %v99 = vpack.c.b16 %v91, %v90
    %108 = vmatprep.subr.bf16.mxu0 0
    %109 = vmatpush1.bf16.msra.mxu0 %v99
    %110 = vmatprep.subr.bf16.mxu0 0
    %111 = vmatpush1.bf16.msra.mxu0 %v98
    %112 = vmatprep.subr.bf16.mxu0 0
    %113 = vmatpush1.bf16.msra.mxu0 %v97
    %114 = vmatprep.subr.bf16.mxu0 0
    %115 = vmatpush1.bf16.msra.mxu0 %v96
    %116 = vmatprep.subr.bf16.mxu0 0
    %117 = vmatpush1.bf16.msra.mxu0 %v95
    %118 = vmatprep.subr.bf16.mxu0 0
    %119 = vmatpush1.bf16.msra.mxu0 %v94
    %120 = vmatprep.subr.bf16.mxu0 0
    %121 = vmatpush1.bf16.msra.mxu0 %v93
    %122 = vmatprep.subr.bf16.mxu0 0
    %123 = vmatpush1.bf16.msra.mxu0 %v92
    %124 = vmatprep.subr.bf16.mxu0 0
    %125 = vmatpush2.bf16.msra.mxu0 0
    %126 = vmatprep.subr.bf16.mxu0 0
    %127 = vmatpush2.bf16.msra.mxu0 0
    %128 = vmatprep.subr.bf16.mxu0 0
    %129 = vmatpush2.bf16.msra.mxu0 0
    %130 = vmatprep.subr.bf16.mxu0 0
    %131 = vmatpush2.bf16.msra.mxu0 0
    %132 = vmatprep.subr.bf16.mxu0 0
    %133 = vmatpush2.bf16.msra.mxu0 0
    %134 = vmatprep.subr.bf16.mxu0 0
    %135 = vmatpush2.bf16.msra.mxu0 0
    %136 = vmatprep.subr.bf16.mxu0 0
    %137 = vmatpush2.bf16.msra.mxu0 0
    %138 = vmatprep.subr.bf16.mxu0 0
    %139 = vmatpush2.bf16.msra.mxu0 0
    %140 = vmatprep.mubr.bf16.mxu0 0
    %141 = vmatmul.mubr.bf16.gmra.mxu0 %v58
    %v142 = vpop.f32.mrf.mxu0
    %v143 = vadd.f32 %v52, %v142
    %v144 = vpop.f32.mrf.mxu0
    %v145 = vpop.f32.mrf.mxu0
    %v146 = vadd.f32 %v52, %v145
    %v147 = vpop.f32.mrf.mxu0
    %148 = vdwg.mxu0
    %149 = vst [vmem:[%s3] sm:$0xff] %v143
    %150 = vst [vmem:[%s3 + $0x8] sm:$0xff] %v146
    // Predicated region
    $region18: #{representation_layer_apply.1} parent=1 // pred_check
      _
    $region19: #{representation_layer_apply.1} parent=1 // pred_check_branch
      %152 = sbr.rel (0) target = $region21
    $region20: #{representation_layer_apply.1} parent=1 // pred_region
      _
    $region21: #{representation_layer_apply.1} parent=1 // pred_fallthru
      _
    // Predicated region
    $region22: #{representation_layer_apply.1} parent=1 // pred_check
      _
    $region23: #{representation_layer_apply.1} parent=1 // pred_check_branch
      %154 = sbr.rel (0) target = $region25
    $region24: #{representation_layer_apply.1} parent=1 // pred_region
      _
    $region25: #{representation_layer_apply.1} parent=1 // pred_fallthru
      _
    %155 = vsyncpa [#allocation3], 1

</llo_original>
